<compile_context>
chip_gen: v7x
topology: tpu7x:2x2x1
jax: 0.10.0
libtpu: 0.0.40
codegen_flags: <defaults>
</compile_context>

<pallas_src>
import jax
import jax.numpy as jnp
from jax import lax
from jax.experimental import pallas as pl
from jax.experimental.pallas import tpu as pltpu


def _basic_block_kernel(x_ref, b1_ref, s1_ref, t1_ref,
                        b2_ref, s2_ref, t2_ref, out_ref, pad_ref):
    """Fused BasicBlock on one batch element, lane-dense (H, W*C) layout."""
    H, WC = x_ref.shape[1], x_ref.shape[2]
    C = (pad_ref.shape[1] - WC) // 2          # (W+2)*C - W*C == 2*C

    xw = x_ref[0]                             # (H, W*C), fully lane-dense

    # Zero-padded activation buffer (padding=1 in H and W), lane-dense rows.
    pad_ref[...] = jnp.zeros_like(pad_ref)
    pad_ref[1:H + 1, C:C + WC] = xw

    # ---- conv1: 3 banded matmuls (one per kernel row), f32 MXU accumulate.
    acc = jnp.zeros((H, WC), jnp.float32)
    for kh in range(3):
        acc = acc + jnp.dot(pad_ref[kh:kh + H, :], b1_ref[kh],
                            preferred_element_type=jnp.float32)
    h = jnp.maximum(acc * s1_ref[...] + t1_ref[...], 0.0)   # BN1 + ReLU

    # ---- conv2 reuses the same padded scratch (borders are still zero).
    pad_ref[1:H + 1, C:C + WC] = h
    acc2 = jnp.zeros((H, WC), jnp.float32)
    for kh in range(3):
        acc2 = acc2 + jnp.dot(pad_ref[kh:kh + H, :], b2_ref[kh],
                              preferred_element_type=jnp.float32)
    y = acc2 * s2_ref[...] + t2_ref[...] + xw                # BN2 + residual
    out_ref[0] = jnp.maximum(y, 0.0).astype(out_ref.dtype)   # final ReLU


def _banded_weights(w_hwio, W):
    """(3,3,Cin,Cout) HWIO -> (3, (W+2)*Cin, W*Cout) banded matrices so the
    conv along W becomes one matmul per kernel row in the lane-dense layout."""
    KH, KW, Cin, Cout = w_hwio.shape
    Wp = W + KW - 1
    eye = jnp.eye(W, dtype=w_hwio.dtype)
    rows = []
    for kh in range(KH):
        bk = jnp.zeros((Wp * Cin, W * Cout), w_hwio.dtype)
        for kw in range(KW):
            sel = jnp.zeros((Wp, W), w_hwio.dtype).at[kw:kw + W, :].set(eye)
            bk = bk + jnp.einsum('pw,ic->piwc', sel,
                                 w_hwio[kh, kw]).reshape(Wp * Cin, W * Cout)
        rows.append(bk)
    return jnp.stack(rows)                    # (3, (W+2)*Cin, W*Cout)


def basic_block_forward(x_nhwc, w1, scale1, bias1, w2, scale2, bias2):
    """x_nhwc: (N, H, W, C) float32.  Returns (N, H, W, C)."""
    N, H, W, C = x_nhwc.shape
    assert w1.shape == (3, 3, C, C) and w2.shape == (3, 3, C, C), \
        "downsample=None requires inplanes == planes"
    WC = W * C
    PWC = (W + 2) * C

    # Contiguous trailing-dim merge -> lane-dense view, no data movement.
    x_ld = x_nhwc.reshape(N, H, WC)

    # Weight / BN preprocessing (tiny; in a real net this is done at init).
    b1 = _banded_weights(w1, W)
    b2 = _banded_weights(w2, W)
    s1 = jnp.tile(scale1.reshape(1, C), (1, W))   # (1, W*C)
    t1 = jnp.tile(bias1.reshape(1, C), (1, W))
    s2 = jnp.tile(scale2.reshape(1, C), (1, W))
    t2 = jnp.tile(bias2.reshape(1, C), (1, W))

    def full(shape):
        return pl.BlockSpec(shape, lambda n: (0,) * len(shape))

    out = pl.pallas_call(
        _basic_block_kernel,
        out_shape=jax.ShapeDtypeStruct((N, H, WC), jnp.float32),
        grid=(N,),
        in_specs=[
            pl.BlockSpec((1, H, WC), lambda n: (n, 0, 0)),   # x (lane-dense)
            full((3, PWC, WC)), full((1, WC)), full((1, WC)),  # conv1/bn1
            full((3, PWC, WC)), full((1, WC)), full((1, WC)),  # conv2/bn2
        ],
        out_specs=pl.BlockSpec((1, H, WC), lambda n: (n, 0, 0)),
        scratch_shapes=[pltpu.VMEM((H + 2, PWC), jnp.float32)],
        compiler_params=pltpu.CompilerParams(
            dimension_semantics=("parallel",)),
        cost_estimate=pl.CostEstimate(
            flops=2 * 2 * N * H * W * 9 * C * C,
            transcendentals=0,
            bytes_accessed=4 * (2 * x_ld.size + b1.size + b2.size)),
    )(x_ld, b1, s1, t1, b2, s2, t2)

    return out.reshape(N, H, W, C)


def _fold_bn(gamma, beta, mean, var, eps=0.001):
    scale = gamma / jnp.sqrt(var + eps)
    bias = beta - mean * scale
    return scale, bias


def _reference(x_nhwc, w1, scale1, bias1, w2, scale2, bias2):
    dn = ("NHWC", "HWIO", "NHWC")
    h = lax.conv_general_dilated(x_nhwc, w1, (1, 1), "SAME",
                                 dimension_numbers=dn)
    h = jnp.maximum(h * scale1 + bias1, 0.0)
    o = lax.conv_general_dilated(h, w2, (1, 1), "SAME",
                                 dimension_numbers=dn)
    o = o * scale2 + bias2
    return jnp.maximum(o + x_nhwc, 0.0)


if __name__ == "__main__":
    key = jax.random.PRNGKey(0)
    ks = jax.random.split(key, 8)

    # BasicBlock(inplanes=8, planes=8, stride=1, downsample=None)
    N, C, H, W = 2, 8, 16, 16            # W * C = 128 -> fully lane-dense

    x_nchw = jax.random.normal(ks[0], (N, C, H, W), jnp.float32)
    x_nhwc = jnp.transpose(x_nchw, (0, 2, 3, 1))   # layout: NCHW -> NHWC

    # conv weights, HWIO
    w1 = jax.random.normal(ks[1], (3, 3, C, C), jnp.float32) * 0.1
    w2 = jax.random.normal(ks[2], (3, 3, C, C), jnp.float32) * 0.1

    # BatchNorm params (eval-mode fold), eps = 0.001 as in the module
    gamma1 = 1.0 + 0.1 * jax.random.normal(ks[3], (C,), jnp.float32)
    beta1 = 0.1 * jax.random.normal(ks[4], (C,), jnp.float32)
    mean1 = 0.05 * jax.random.normal(ks[5], (C,), jnp.float32)
    var1 = 1.0 + 0.1 * jnp.abs(jax.random.normal(ks[6], (C,), jnp.float32))
    gamma2 = 1.0 + 0.1 * jax.random.normal(ks[7], (C,), jnp.float32)
    beta2 = jnp.zeros((C,), jnp.float32)
    mean2 = jnp.zeros((C,), jnp.float32)
    var2 = jnp.ones((C,), jnp.float32)

    scale1, bias1 = _fold_bn(gamma1, beta1, mean1, var1)
    scale2, bias2 = _fold_bn(gamma2, beta2, mean2, var2)

    fwd = jax.jit(basic_block_forward)
    out = jax.block_until_ready(
        fwd(x_nhwc, w1, scale1, bias1, w2, scale2, bias2))

    ref = _reference(x_nhwc, w1, scale1, bias1, w2, scale2, bias2)
    assert out.shape == (N, H, W, C)
    assert jnp.allclose(out, ref, rtol=1e-3, atol=1e-3), \
        float(jnp.max(jnp.abs(out - ref)))

    print("KERNEL_OK")
</pallas_src>

<mosaic_0001>
module attributes {stable_mosaic.version = 11 : i64} {
  func.func @_basic_block_kernel(%arg0: i32, %arg1: memref<1x16x128xf32, #tpu.memory_space<vmem>>, %arg2: memref<3x144x128xf32, #tpu.memory_space<vmem>>, %arg3: memref<1x128xf32, #tpu.memory_space<vmem>>, %arg4: memref<1x128xf32, #tpu.memory_space<vmem>>, %arg5: memref<3x144x128xf32, #tpu.memory_space<vmem>>, %arg6: memref<1x128xf32, #tpu.memory_space<vmem>>, %arg7: memref<1x128xf32, #tpu.memory_space<vmem>>, %arg8: memref<1x16x128xf32, #tpu.memory_space<vmem>>, %arg9: memref<18x144xf32, #tpu.memory_space<vmem>>) attributes {dimension_semantics = [#tpu.dimension_semantics<parallel>], iteration_bounds = array<i64: 2>, scalar_prefetch = 0 : i64, scratch_operands = 1 : i64, tpu.core_type = #tpu.core_type<tc>, window_params = [{transform_indices = @transform_0, window_bounds = array<i64: 1, 16, 128>}, {pipeline_mode = #tpu.pipeline_mode<synchronous>, transform_indices = @transform_1, window_bounds = array<i64: 3, 144, 128>}, {pipeline_mode = #tpu.pipeline_mode<synchronous>, transform_indices = @transform_2, window_bounds = array<i64: 1, 128>}, {pipeline_mode = #tpu.pipeline_mode<synchronous>, transform_indices = @transform_3, window_bounds = array<i64: 1, 128>}, {pipeline_mode = #tpu.pipeline_mode<synchronous>, transform_indices = @transform_4, window_bounds = array<i64: 3, 144, 128>}, {pipeline_mode = #tpu.pipeline_mode<synchronous>, transform_indices = @transform_5, window_bounds = array<i64: 1, 128>}, {pipeline_mode = #tpu.pipeline_mode<synchronous>, transform_indices = @transform_6, window_bounds = array<i64: 1, 128>}, {transform_indices = @transform_7, window_bounds = array<i64: 1, 16, 128>}]} {
    %c0 = arith.constant 0 : index
    %c0_0 = arith.constant 0 : index
    %c0_1 = arith.constant 0 : index
    %0 = vector.load %arg1[%c0, %c0_0, %c0_1] : memref<1x16x128xf32, #tpu.memory_space<vmem>>, vector<1x16x128xf32>
    %1 = vector.shape_cast %0 : vector<1x16x128xf32> to vector<16x128xf32>
    %cst = arith.constant 0.000000e+00 : f32
    %2 = vector.broadcast %cst : f32 to vector<18x144xf32>
    %c0_2 = arith.constant 0 : index
    %c0_3 = arith.constant 0 : index
    %3 = vector.load %arg9[%c0_2, %c0_3] : memref<18x144xf32, #tpu.memory_space<vmem>>, vector<18x144xf32>
    tpu.vector_store %arg9[%c0_2, %c0_3], %2 {strides = array<i32>} : memref<18x144xf32, #tpu.memory_space<vmem>>, vector<18x144xf32>,
    %c1 = arith.constant 1 : index
    %c8 = arith.constant 8 : index
    %4 = vector.load %arg9[%c1, %c8] : memref<18x144xf32, #tpu.memory_space<vmem>>, vector<16x128xf32>
    tpu.vector_store %arg9[%c1, %c8], %1 {strides = array<i32>} : memref<18x144xf32, #tpu.memory_space<vmem>>, vector<16x128xf32>,
    %cst_4 = arith.constant 0.000000e+00 : f32
    %5 = vector.broadcast %cst_4 : f32 to vector<16x128xf32>
    %c0_5 = arith.constant 0 : index
    %c0_6 = arith.constant 0 : index
    %6 = vector.load %arg9[%c0_5, %c0_6] : memref<18x144xf32, #tpu.memory_space<vmem>>, vector<16x144xf32>
    %c0_7 = arith.constant 0 : index
    %c0_8 = arith.constant 0 : index
    %c0_9 = arith.constant 0 : index
    %7 = vector.load %arg2[%c0_7, %c0_8, %c0_9] : memref<3x144x128xf32, #tpu.memory_space<vmem>>, vector<1x144x128xf32>
    %8 = vector.shape_cast %7 : vector<1x144x128xf32> to vector<144x128xf32>
    %cst_10 = arith.constant dense<0.000000e+00> : vector<16x128xf32>
    %9 = tpu.matmul %6, %8, %cst_10 {dimension_numbers = #tpu.dot_dimension_numbers<[1], [0], [0], [1], [0, 0, 1, 1], [], []>} : vector<16x144xf32>, vector<144x128xf32>, vector<16x128xf32> -> vector<16x128xf32>
    %10 = arith.addf %5, %9 : vector<16x128xf32>
    %c1_11 = arith.constant 1 : index
    %c0_12 = arith.constant 0 : index
    %11 = vector.load %arg9[%c1_11, %c0_12] : memref<18x144xf32, #tpu.memory_space<vmem>>, vector<16x144xf32>
    %c1_13 = arith.constant 1 : index
    %c0_14 = arith.constant 0 : index
    %c0_15 = arith.constant 0 : index
    %12 = vector.load %arg2[%c1_13, %c0_14, %c0_15] : memref<3x144x128xf32, #tpu.memory_space<vmem>>, vector<1x144x128xf32>
    %13 = vector.shape_cast %12 : vector<1x144x128xf32> to vector<144x128xf32>
    %cst_16 = arith.constant dense<0.000000e+00> : vector<16x128xf32>
    %14 = tpu.matmul %11, %13, %cst_16 {dimension_numbers = #tpu.dot_dimension_numbers<[1], [0], [0], [1], [0, 0, 1, 1], [], []>} : vector<16x144xf32>, vector<144x128xf32>, vector<16x128xf32> -> vector<16x128xf32>
    %15 = arith.addf %10, %14 : vector<16x128xf32>
    %c2 = arith.constant 2 : index
    %c0_17 = arith.constant 0 : index
    %16 = vector.load %arg9[%c2, %c0_17] : memref<18x144xf32, #tpu.memory_space<vmem>>, vector<16x144xf32>
    %c2_18 = arith.constant 2 : index
    %c0_19 = arith.constant 0 : index
    %c0_20 = arith.constant 0 : index
    %17 = vector.load %arg2[%c2_18, %c0_19, %c0_20] : memref<3x144x128xf32, #tpu.memory_space<vmem>>, vector<1x144x128xf32>
    %18 = vector.shape_cast %17 : vector<1x144x128xf32> to vector<144x128xf32>
    %cst_21 = arith.constant dense<0.000000e+00> : vector<16x128xf32>
    %19 = tpu.matmul %16, %18, %cst_21 {dimension_numbers = #tpu.dot_dimension_numbers<[1], [0], [0], [1], [0, 0, 1, 1], [], []>} : vector<16x144xf32>, vector<144x128xf32>, vector<16x128xf32> -> vector<16x128xf32>
    %20 = arith.addf %15, %19 : vector<16x128xf32>
    %c0_22 = arith.constant 0 : index
    %c0_23 = arith.constant 0 : index
    %21 = vector.load %arg3[%c0_22, %c0_23] : memref<1x128xf32, #tpu.memory_space<vmem>>, vector<1x128xf32>
    %22 = vector.broadcast %21 : vector<1x128xf32> to vector<16x128xf32>
    %23 = arith.mulf %20, %22 : vector<16x128xf32>
    %c0_24 = arith.constant 0 : index
    %c0_25 = arith.constant 0 : index
    %24 = vector.load %arg4[%c0_24, %c0_25] : memref<1x128xf32, #tpu.memory_space<vmem>>, vector<1x128xf32>
    %25 = vector.broadcast %24 : vector<1x128xf32> to vector<16x128xf32>
    %26 = arith.addf %23, %25 : vector<16x128xf32>
    %cst_26 = arith.constant 0.000000e+00 : f32
    %27 = vector.broadcast %cst_26 : f32 to vector<16x128xf32>
    %28 = arith.maximumf %26, %27 : vector<16x128xf32>
    %c1_27 = arith.constant 1 : index
    %c8_28 = arith.constant 8 : index
    %29 = vector.load %arg9[%c1_27, %c8_28] : memref<18x144xf32, #tpu.memory_space<vmem>>, vector<16x128xf32>
    tpu.vector_store %arg9[%c1_27, %c8_28], %28 {strides = array<i32>} : memref<18x144xf32, #tpu.memory_space<vmem>>, vector<16x128xf32>,
    %cst_29 = arith.constant 0.000000e+00 : f32
    %30 = vector.broadcast %cst_29 : f32 to vector<16x128xf32>
    %c0_30 = arith.constant 0 : index
    %c0_31 = arith.constant 0 : index
    %31 = vector.load %arg9[%c0_30, %c0_31] : memref<18x144xf32, #tpu.memory_space<vmem>>, vector<16x144xf32>
    %c0_32 = arith.constant 0 : index
    %c0_33 = arith.constant 0 : index
    %c0_34 = arith.constant 0 : index
    %32 = vector.load %arg5[%c0_32, %c0_33, %c0_34] : memref<3x144x128xf32, #tpu.memory_space<vmem>>, vector<1x144x128xf32>
    %33 = vector.shape_cast %32 : vector<1x144x128xf32> to vector<144x128xf32>
    %cst_35 = arith.constant dense<0.000000e+00> : vector<16x128xf32>
    %34 = tpu.matmul %31, %33, %cst_35 {dimension_numbers = #tpu.dot_dimension_numbers<[1], [0], [0], [1], [0, 0, 1, 1], [], []>} : vector<16x144xf32>, vector<144x128xf32>, vector<16x128xf32> -> vector<16x128xf32>
    %35 = arith.addf %30, %34 : vector<16x128xf32>
    %c1_36 = arith.constant 1 : index
    %c0_37 = arith.constant 0 : index
    %36 = vector.load %arg9[%c1_36, %c0_37] : memref<18x144xf32, #tpu.memory_space<vmem>>, vector<16x144xf32>
    %c1_38 = arith.constant 1 : index
    %c0_39 = arith.constant 0 : index
    %c0_40 = arith.constant 0 : index
    %37 = vector.load %arg5[%c1_38, %c0_39, %c0_40] : memref<3x144x128xf32, #tpu.memory_space<vmem>>, vector<1x144x128xf32>
    %38 = vector.shape_cast %37 : vector<1x144x128xf32> to vector<144x128xf32>
    %cst_41 = arith.constant dense<0.000000e+00> : vector<16x128xf32>
    %39 = tpu.matmul %36, %38, %cst_41 {dimension_numbers = #tpu.dot_dimension_numbers<[1], [0], [0], [1], [0, 0, 1, 1], [], []>} : vector<16x144xf32>, vector<144x128xf32>, vector<16x128xf32> -> vector<16x128xf32>
    %40 = arith.addf %35, %39 : vector<16x128xf32>
    %c2_42 = arith.constant 2 : index
    %c0_43 = arith.constant 0 : index
    %41 = vector.load %arg9[%c2_42, %c0_43] : memref<18x144xf32, #tpu.memory_space<vmem>>, vector<16x144xf32>
    %c2_44 = arith.constant 2 : index
    %c0_45 = arith.constant 0 : index
    %c0_46 = arith.constant 0 : index
    %42 = vector.load %arg5[%c2_44, %c0_45, %c0_46] : memref<3x144x128xf32, #tpu.memory_space<vmem>>, vector<1x144x128xf32>
    %43 = vector.shape_cast %42 : vector<1x144x128xf32> to vector<144x128xf32>
    %cst_47 = arith.constant dense<0.000000e+00> : vector<16x128xf32>
    %44 = tpu.matmul %41, %43, %cst_47 {dimension_numbers = #tpu.dot_dimension_numbers<[1], [0], [0], [1], [0, 0, 1, 1], [], []>} : vector<16x144xf32>, vector<144x128xf32>, vector<16x128xf32> -> vector<16x128xf32>
    %45 = arith.addf %40, %44 : vector<16x128xf32>
    %c0_48 = arith.constant 0 : index
    %c0_49 = arith.constant 0 : index
    %46 = vector.load %arg6[%c0_48, %c0_49] : memref<1x128xf32, #tpu.memory_space<vmem>>, vector<1x128xf32>
    %47 = vector.broadcast %46 : vector<1x128xf32> to vector<16x128xf32>
    %48 = arith.mulf %45, %47 : vector<16x128xf32>
    %c0_50 = arith.constant 0 : index
    %c0_51 = arith.constant 0 : index
    %49 = vector.load %arg7[%c0_50, %c0_51] : memref<1x128xf32, #tpu.memory_space<vmem>>, vector<1x128xf32>
    %50 = vector.broadcast %49 : vector<1x128xf32> to vector<16x128xf32>
    %51 = arith.addf %48, %50 : vector<16x128xf32>
    %52 = arith.addf %51, %1 : vector<16x128xf32>
    %cst_52 = arith.constant 0.000000e+00 : f32
    %53 = vector.broadcast %cst_52 : f32 to vector<16x128xf32>
    %54 = arith.maximumf %52, %53 : vector<16x128xf32>
    %c0_53 = arith.constant 0 : index
    %c0_54 = arith.constant 0 : index
    %c0_55 = arith.constant 0 : index
    %55 = vector.load %arg8[%c0_53, %c0_54, %c0_55] : memref<1x16x128xf32, #tpu.memory_space<vmem>>, vector<1x16x128xf32>
    %56 = vector.shape_cast %55 : vector<1x16x128xf32> to vector<16x128xf32>
    %57 = vector.shape_cast %54 : vector<16x128xf32> to vector<1x16x128xf32>
    tpu.vector_store %arg8[%c0_53, %c0_54, %c0_55], %57 {strides = array<i32>} : memref<1x16x128xf32, #tpu.memory_space<vmem>>, vector<1x16x128xf32>,
    return
  }
  func.func @transform_0(%arg0: i32) -> (i32, i32, i32) {
    %c0_i32 = arith.constant 0 : i32
    %c0_i32_0 = arith.constant 0 : i32
    %c0_i32_1 = arith.constant 0 : i32
    return %arg0, %c0_i32, %c0_i32_0 : i32, i32, i32
  }
  func.func @transform_1(%arg0: i32) -> (i32, i32, i32) {
    %c0_i32 = arith.constant 0 : i32
    %c0_i32_0 = arith.constant 0 : i32
    %c0_i32_1 = arith.constant 0 : i32
    %c0_i32_2 = arith.constant 0 : i32
    return %c0_i32, %c0_i32_0, %c0_i32_1 : i32, i32, i32
  }
  func.func @transform_2(%arg0: i32) -> (i32, i32) {
    %c0_i32 = arith.constant 0 : i32
    %c0_i32_0 = arith.constant 0 : i32
    %c0_i32_1 = arith.constant 0 : i32
    return %c0_i32, %c0_i32_0 : i32, i32
  }
  func.func @transform_3(%arg0: i32) -> (i32, i32) {
    %c0_i32 = arith.constant 0 : i32
    %c0_i32_0 = arith.constant 0 : i32
    %c0_i32_1 = arith.constant 0 : i32
    return %c0_i32, %c0_i32_0 : i32, i32
  }
  func.func @transform_4(%arg0: i32) -> (i32, i32, i32) {
    %c0_i32 = arith.constant 0 : i32
    %c0_i32_0 = arith.constant 0 : i32
    %c0_i32_1 = arith.constant 0 : i32
    %c0_i32_2 = arith.constant 0 : i32
    return %c0_i32, %c0_i32_0, %c0_i32_1 : i32, i32, i32
  }
  func.func @transform_5(%arg0: i32) -> (i32, i32) {
    %c0_i32 = arith.constant 0 : i32
    %c0_i32_0 = arith.constant 0 : i32
    %c0_i32_1 = arith.constant 0 : i32
    return %c0_i32, %c0_i32_0 : i32, i32
  }
  func.func @transform_6(%arg0: i32) -> (i32, i32) {
    %c0_i32 = arith.constant 0 : i32
    %c0_i32_0 = arith.constant 0 : i32
    %c0_i32_1 = arith.constant 0 : i32
    return %c0_i32, %c0_i32_0 : i32, i32
  }
  func.func @transform_7(%arg0: i32) -> (i32, i32, i32) {
    %c0_i32 = arith.constant 0 : i32
    %c0_i32_0 = arith.constant 0 : i32
    %c0_i32_1 = arith.constant 0 : i32
    return %arg0, %c0_i32, %c0_i32_0 : i32, i32, i32
  }
}

</mosaic_0001>

<llo_original>
// kernel: basic_block_forward.1
$region0: #{basic_block_forward.1}
  #allocation0 [shape = 'u32[]', space=smem, size = 0x4, offset = 0x4, fixed_abs, tag = 'smem constant byte address 0x4 - core index']
  #allocation1 [shape = 'u32[144,128]{1,0:T(1,128)}', space=vmem, size = 0x12000, scoped, tag = 'internal scratch']
  #allocation2 [shape = 'f32[18,144]{1,0:T(8,128)}', space=vmem, size = 0x6000, scoped, tag = 'scratch operand']
  %s0 = inlined_call_operand.vmem [shape: f32[2,16,128], index: 0, kind: input, shape index: {}]
  %s1 = inlined_call_operand.vmem [shape: f32[3,144,128], index: 1, kind: input, shape index: {}]
  %s2 = inlined_call_operand.vmem [shape: f32[1,128], index: 2, kind: input, shape index: {}]
  %s3 = inlined_call_operand.vmem [shape: f32[1,128], index: 3, kind: input, shape index: {}]
  %s4 = inlined_call_operand.vmem [shape: f32[3,144,128], index: 4, kind: input, shape index: {}]
  %s5 = inlined_call_operand.vmem [shape: f32[1,128], index: 5, kind: input, shape index: {}]
  %s6 = inlined_call_operand.vmem [shape: f32[1,128], index: 6, kind: input, shape index: {}]
  %s7 = inlined_call_operand.vmem [shape: f32[2,16,128], index: 7, kind: output, shape index: {}]
  %s8 = sld [smem:[#allocation0]]
  $region61: #{basic_block_forward.1} parent=0
    _
  %s10 = ssub.s32 1, %s8
  %s11 = scalar_select 0, %s10, %s8
  loop: start=0, step=1, limit=4
  $region2: #{basic_block_forward.1} parent=0 // loop_pre_header
    _
  $region3: #{basic_block_forward.1} parent=0 // loop_header
    %s13 = sphi 0, %s17
    %p14 = scmp.ge.s32.totalorder %s13, 4
    %s23 = sphi 0, %s25
    %s26 = sphi 0, %s23
    %s27 = sphi 0, %s26
    %s43 = sphi 0, %s27
    %s47 = sphi 0, %s47
    %s49 = sphi 0, %s47
    %s50 = sphi 0, %s49
    %s64 = sphi 0, %s50
    %s68 = sphi 0, %s68
    %s70 = sphi 0, %s68
    %s71 = sphi 0, %s70
    %s85 = sphi 0, %s71
    %s89 = sphi 0, %s89
    %s91 = sphi 0, %s89
    %s92 = sphi 0, %s91
    %s106 = sphi 0, %s92
    %s110 = sphi 0, %s110
    %s112 = sphi 0, %s110
    %s113 = sphi 0, %s112
    %s127 = sphi 0, %s113
    %s131 = sphi 0, %s131
    %s133 = sphi 0, %s131
    %s134 = sphi 0, %s133
    %s148 = sphi 0, %s134
    %s152 = sphi 0, %s152
    %s154 = sphi 0, %s152
    %s155 = sphi 0, %s154
    %s169 = sphi 0, %s155
    %s175 = sphi 0, %s177
    %s178 = sphi 0, %s175
    %s179 = sphi 0, %s178
    %s195 = sphi 0, %s179
  $region4: #{basic_block_forward.1} parent=0 // loop_header_branch
    %16 = sbr.rel (%p14) target = $region8
  $region5: #{basic_block_forward.1} parent=0 // loop_body
    %s18 = ssub.s32 %s13, 1
    %s19 = ssub.s32 %s13, 2
    %s20 = sadd.s32 %s13, 1
    %s21 = ssub.s32 %s13, %s20
    %p22 = scmp.eq.s32.totalorder %s21, 0
    %s24 = sadd.s32 %s23, 1
    %s25 = scalar_select %p22, %s23, %s24
    %p28 = pneg %p22
    %p29 = scmp.eq.s32.totalorder %s13, 1
    %p30 = por %p28, %p29
    %p31 = scmp.ne.s32.totalorder %s23, %s26
    %p32 = scmp.eq.s32.totalorder %s13, 0
    %p33 = por %p31, %p32
    %p34 = scmp.ne.s32.totalorder %s23, %s26
    %p35 = scmp.eq.s32.totalorder %s18, 1
    %p36 = por %p34, %p35
    %p37 = scmp.ne.s32.totalorder %s26, %s27
    %p38 = scmp.eq.s32.totalorder %s18, 0
    %p39 = por %p37, %p38
    %p40 = scmp.ne.s32.totalorder %s26, %s27
    %p41 = scmp.eq.s32.totalorder %s19, 1
    %p42 = por %p40, %p41
    %p44 = scmp.ne.s32.totalorder %s27, %s43
    %p45 = scmp.eq.s32.totalorder %s19, 0
    %p46 = por %p44, %p45
    %s48 = sadd.s32 %s47, 1
    %p51 = scmp.eq.s32.totalorder %s13, 1
    %p52 = scmp.ne.s32.totalorder %s47, %s49
    %p53 = scmp.eq.s32.totalorder %s13, 0
    %p54 = por %p52, %p53
    %p55 = scmp.ne.s32.totalorder %s47, %s49
    %p56 = scmp.eq.s32.totalorder %s18, 1
    %p57 = por %p55, %p56
    %p58 = scmp.ne.s32.totalorder %s49, %s50
    %p59 = scmp.eq.s32.totalorder %s18, 0
    %p60 = por %p58, %p59
    %p61 = scmp.ne.s32.totalorder %s49, %s50
    %p62 = scmp.eq.s32.totalorder %s19, 1
    %p63 = por %p61, %p62
    %p65 = scmp.ne.s32.totalorder %s50, %s64
    %p66 = scmp.eq.s32.totalorder %s19, 0
    %p67 = por %p65, %p66
    %s69 = sadd.s32 %s68, 1
    %p72 = scmp.eq.s32.totalorder %s13, 1
    %p73 = scmp.ne.s32.totalorder %s68, %s70
    %p74 = scmp.eq.s32.totalorder %s13, 0
    %p75 = por %p73, %p74
    %p76 = scmp.ne.s32.totalorder %s68, %s70
    %p77 = scmp.eq.s32.totalorder %s18, 1
    %p78 = por %p76, %p77
    %p79 = scmp.ne.s32.totalorder %s70, %s71
    %p80 = scmp.eq.s32.totalorder %s18, 0
    %p81 = por %p79, %p80
    %p82 = scmp.ne.s32.totalorder %s70, %s71
    %p83 = scmp.eq.s32.totalorder %s19, 1
    %p84 = por %p82, %p83
    %p86 = scmp.ne.s32.totalorder %s71, %s85
    %p87 = scmp.eq.s32.totalorder %s19, 0
    %p88 = por %p86, %p87
    %s90 = sadd.s32 %s89, 1
    %p93 = scmp.eq.s32.totalorder %s13, 1
    %p94 = scmp.ne.s32.totalorder %s89, %s91
    %p95 = scmp.eq.s32.totalorder %s13, 0
    %p96 = por %p94, %p95
    %p97 = scmp.ne.s32.totalorder %s89, %s91
    %p98 = scmp.eq.s32.totalorder %s18, 1
    %p99 = por %p97, %p98
    %p100 = scmp.ne.s32.totalorder %s91, %s92
    %p101 = scmp.eq.s32.totalorder %s18, 0
    %p102 = por %p100, %p101
    %p103 = scmp.ne.s32.totalorder %s91, %s92
    %p104 = scmp.eq.s32.totalorder %s19, 1
    %p105 = por %p103, %p104
    %p107 = scmp.ne.s32.totalorder %s92, %s106
    %p108 = scmp.eq.s32.totalorder %s19, 0
    %p109 = por %p107, %p108
    %s111 = sadd.s32 %s110, 1
    %p114 = scmp.eq.s32.totalorder %s13, 1
    %p115 = scmp.ne.s32.totalorder %s110, %s112
    %p116 = scmp.eq.s32.totalorder %s13, 0
    %p117 = por %p115, %p116
    %p118 = scmp.ne.s32.totalorder %s110, %s112
    %p119 = scmp.eq.s32.totalorder %s18, 1
    %p120 = por %p118, %p119
    %p121 = scmp.ne.s32.totalorder %s112, %s113
    %p122 = scmp.eq.s32.totalorder %s18, 0
    %p123 = por %p121, %p122
    %p124 = scmp.ne.s32.totalorder %s112, %s113
    %p125 = scmp.eq.s32.totalorder %s19, 1
    %p126 = por %p124, %p125
    %p128 = scmp.ne.s32.totalorder %s113, %s127
    %p129 = scmp.eq.s32.totalorder %s19, 0
    %p130 = por %p128, %p129
    %s132 = sadd.s32 %s131, 1
    %p135 = scmp.eq.s32.totalorder %s13, 1
    %p136 = scmp.ne.s32.totalorder %s131, %s133
    %p137 = scmp.eq.s32.totalorder %s13, 0
    %p138 = por %p136, %p137
    %p139 = scmp.ne.s32.totalorder %s131, %s133
    %p140 = scmp.eq.s32.totalorder %s18, 1
    %p141 = por %p139, %p140
    %p142 = scmp.ne.s32.totalorder %s133, %s134
    %p143 = scmp.eq.s32.totalorder %s18, 0
    %p144 = por %p142, %p143
    %p145 = scmp.ne.s32.totalorder %s133, %s134
    %p146 = scmp.eq.s32.totalorder %s19, 1
    %p147 = por %p145, %p146
    %p149 = scmp.ne.s32.totalorder %s134, %s148
    %p150 = scmp.eq.s32.totalorder %s19, 0
    %p151 = por %p149, %p150
    %s153 = sadd.s32 %s152, 1
    %p156 = scmp.eq.s32.totalorder %s13, 1
    %p157 = scmp.ne.s32.totalorder %s152, %s154
    %p158 = scmp.eq.s32.totalorder %s13, 0
    %p159 = por %p157, %p158
    %p160 = scmp.ne.s32.totalorder %s152, %s154
    %p161 = scmp.eq.s32.totalorder %s18, 1
    %p162 = por %p160, %p161
    %p163 = scmp.ne.s32.totalorder %s154, %s155
    %p164 = scmp.eq.s32.totalorder %s18, 0
    %p165 = por %p163, %p164
    %p166 = scmp.ne.s32.totalorder %s154, %s155
    %p167 = scmp.eq.s32.totalorder %s19, 1
    %p168 = por %p166, %p167
    %p170 = scmp.ne.s32.totalorder %s155, %s169
    %p171 = scmp.eq.s32.totalorder %s19, 0
    %p172 = por %p170, %p171
    %s173 = ssub.s32 %s13, %s20
    %p174 = scmp.eq.s32.totalorder %s173, 0
    %s176 = sadd.s32 %s175, 1
    %s177 = scalar_select %p174, %s175, %s176
    %p180 = pneg %p174
    %p181 = scmp.eq.s32.totalorder %s13, 1
    %p182 = por %p180, %p181
    %p183 = scmp.ne.s32.totalorder %s175, %s178
    %p184 = scmp.eq.s32.totalorder %s13, 0
    %p185 = por %p183, %p184
    %p186 = scmp.ne.s32.totalorder %s175, %s178
    %p187 = scmp.eq.s32.totalorder %s18, 1
    %p188 = por %p186, %p187
    %p189 = scmp.ne.s32.totalorder %s178, %s179
    %p190 = scmp.eq.s32.totalorder %s18, 0
    %p191 = por %p189, %p190
    %p192 = scmp.ne.s32.totalorder %s178, %s179
    %p193 = scmp.eq.s32.totalorder %s19, 1
    %p194 = por %p192, %p193
    %p196 = scmp.ne.s32.totalorder %s179, %s195
    %p197 = scmp.eq.s32.totalorder %s19, 0
    %p198 = por %p196, %p197
    %p199 = scmp.le.s32.totalorder 1, %s13
    %p200 = scmp.lt.s32.totalorder %s13, 3
    %p201 = pnand %p199, %p200
    %p202 = pneg %p201
    // Predicated region
    $region9: #{basic_block_forward.1} parent=5 // pred_check
      _
    $region10: #{basic_block_forward.1} parent=5 // pred_check_branch
      %204 = sbr.rel (%p201) target = $region12
    $region11: #{basic_block_forward.1} parent=5 // pred_region
      %s205 = ssub.s32 %s13, 1
      // Predicated region
      $region13: #{basic_block_forward.1} parent=11 // pred_check
        %p206 = pneg %p60
      $region14: #{basic_block_forward.1} parent=11 // pred_check_branch
        %208 = sbr.rel (%p206) target = $region16
      $region15: #{basic_block_forward.1} parent=11 // pred_region
        _
      $region16: #{basic_block_forward.1} parent=11 // pred_fallthru
        _
      // Predicated region
      $region17: #{basic_block_forward.1} parent=11 // pred_check
        %p209 = pneg %p81
      $region18: #{basic_block_forward.1} parent=11 // pred_check_branch
        %211 = sbr.rel (%p209) target = $region20
      $region19: #{basic_block_forward.1} parent=11 // pred_region
        _
      $region20: #{basic_block_forward.1} parent=11 // pred_fallthru
        _
      // Predicated region
      $region21: #{basic_block_forward.1} parent=11 // pred_check
        %p212 = pneg %p102
      $region22: #{basic_block_forward.1} parent=11 // pred_check_branch
        %214 = sbr.rel (%p212) target = $region24
      $region23: #{basic_block_forward.1} parent=11 // pred_region
        _
      $region24: #{basic_block_forward.1} parent=11 // pred_fallthru
        _
      // Predicated region
      $region25: #{basic_block_forward.1} parent=11 // pred_check
        %p215 = pneg %p123
      $region26: #{basic_block_forward.1} parent=11 // pred_check_branch
        %217 = sbr.rel (%p215) target = $region28
      $region27: #{basic_block_forward.1} parent=11 // pred_region
        _
      $region28: #{basic_block_forward.1} parent=11 // pred_fallthru
        _
      // Predicated region
      $region29: #{basic_block_forward.1} parent=11 // pred_check
        %p218 = pneg %p144
      $region30: #{basic_block_forward.1} parent=11 // pred_check_branch
        %220 = sbr.rel (%p218) target = $region32
      $region31: #{basic_block_forward.1} parent=11 // pred_region
        _
      $region32: #{basic_block_forward.1} parent=11 // pred_fallthru
        _
      // Predicated region
      $region33: #{basic_block_forward.1} parent=11 // pred_check
        %p221 = pneg %p165
      $region34: #{basic_block_forward.1} parent=11 // pred_check_branch
        %223 = sbr.rel (%p221) target = $region36
      $region35: #{basic_block_forward.1} parent=11 // pred_region
        _
      $region36: #{basic_block_forward.1} parent=11 // pred_fallthru
        _
    $region12: #{basic_block_forward.1} parent=5 // pred_fallthru
      _
    %p224 = scmp.lt.s32.totalorder %s13, 2
    // Predicated region
    $region37: #{basic_block_forward.1} parent=5 // pred_check
      %p225 = pneg %p224
    $region38: #{basic_block_forward.1} parent=5 // pred_check_branch
      %227 = sbr.rel (%p225) target = $region40
    $region39: #{basic_block_forward.1} parent=5 // pred_region
      // Predicated region
      $region41: #{basic_block_forward.1} parent=39 // pred_check
        %p228 = pneg %p33
      $region42: #{basic_block_forward.1} parent=39 // pred_check_branch
        %230 = sbr.rel (%p228) target = $region44
      $region43: #{basic_block_forward.1} parent=39 // pred_region
        %p231 = scmp.lt.s32.totalorder %s13, 1
        %s232 = scalar_select %p231, %s13, 1
        %s233 = smul.addr %s232, 2
        %s234 = smul.addr %s233, 8
        %s235 = scalar_lea.vmem %s0, %s234
      $region44: #{basic_block_forward.1} parent=39 // pred_fallthru
        _
    $region40: #{basic_block_forward.1} parent=5 // pred_fallthru
      _
    %p236 = scmp.le.s32.totalorder 1, %s13
    %p237 = scmp.lt.s32.totalorder %s13, 3
    %p238 = pnand %p236, %p237
    %p239 = pneg %p238
    // Predicated region
    $region45: #{basic_block_forward.1} parent=5 // pred_check
      _
    $region46: #{basic_block_forward.1} parent=5 // pred_check_branch
      %241 = sbr.rel (%p238) target = $region48
    $region47: #{basic_block_forward.1} parent=5 // pred_region
      %s242 = ssub.s32 %s13, 1
      %p243 = scmp.lt.s32.totalorder %s18, 1
      %s244 = scalar_select %p243, %s18, 1
      %s245 = smul.addr %s244, 2
      %s246 = smul.addr %s245, 8
      %s247 = scalar_lea.vmem %s0, %s246
      %p248 = pneg %p39
      %p249 = pneg %p36
      %p250 = pneg %p60
      %p251 = pneg %p57
      %p252 = pneg %p81
      %p253 = pneg %p78
      %p254 = pneg %p102
      %p255 = pneg %p99
      %p256 = pneg %p123
      %p257 = pneg %p120
      %p258 = pneg %p144
      %p259 = pneg %p141
      %p260 = pneg %p165
      %p261 = pneg %p162
      %p262 = pneg %p191
      %p263 = pneg %p188
      %p264 = scmp.lt.s32.totalorder %s18, 1
      %s265 = scalar_select %p264, %s18, 1
      %s266 = smul.addr %s265, 2
      %s267 = smul.addr %s266, 8
      %s268 = scalar_lea.vmem %s7, %s267
      %p269 = scmp.lt.s32.totalorder %s18, 1
      %s270 = scalar_select %p269, %s18, 1
      %s271 = smul.addr %s270, 2
      %s272 = smul.addr %s271, 8
      %s273 = scalar_lea.vmem %s0, %s272
      %p274 = scmp.lt.s32.totalorder %s18, 1
      %s275 = scalar_select %p274, %s18, 1
      %s276 = smul.addr %s275, 2
      %s277 = smul.addr %s276, 8
      %s278 = scalar_lea.vmem %s7, %s277
      %v279 = vld [vmem:[%s273] sm:$0xff]
      %v280 = vld [vmem:[%s273 + $0x8] sm:$0xff]
      %281 = vst [vmem:[#allocation2] sm:$0xff] 0.0
      %vm282 = vcmask 130048
      %283 = vst.msk [vmem:[#allocation2 + $0x8] sm:$0xff] %vm282, 0.0
      %284 = vst [vmem:[#allocation2 + $0x10] sm:$0xff] 0.0
      %285 = vst.msk [vmem:[#allocation2 + $0x18] sm:$0xff] %vm282, 0.0
      %286 = vst [vmem:[#allocation2 + $0x20] sm:$0x3] 0.0
      %vm287 = vcmask 123904
      %288 = vst.msk [vmem:[#allocation2 + $0x28] sm:$0x3] %vm287, 0.0
      %vm291 = vcmask 1040384
      %v292 = vrot.slane %v279, 7
      %v293 = vrot.slane %v280, 7
      %v294 = vsel %vm291, %v292, %v293
      %295 = vrot.lane.b32.xlu0 %v292, 8
      %v296 = vpop.permute.xlu0 %295
      %297 = vrot.lane.b32.xlu0 %v294, 8
      %v298 = vpop.permute.xlu0 %297
      %299 = vrot.lane.b32.xlu0 %v293, 8
      %v300 = vpop.permute.xlu0 %299
      %vm304 = vcmask 1047617
      %305 = vst.msk [vmem:[#allocation2] sm:$0xfe] %vm304, %v296
      %vm306 = vcmask 64513
      %307 = vst.msk [vmem:[#allocation2 + $0x8] sm:$0xfe] %vm306, %v296
      %vm308 = vcmask 1047616
      %309 = vst.msk [vmem:[#allocation2 + $0x10] sm:$0xff] %vm308, %v298
      %vm310 = vcmask 64512
      %311 = vst.msk [vmem:[#allocation2 + $0x18] sm:$0xff] %vm310, %v298
      %vm312 = vcmask 1040448
      %313 = vst.msk [vmem:[#allocation2 + $0x20] sm:$0x1] %vm312, %v300
      %vm314 = vcmask 57344
      %315 = vst.msk [vmem:[#allocation2 + $0x28] sm:$0x1] %vm314, %v300
      %v316 = vld [vmem:[#allocation2] sm:$0xff]
      %v317 = vld [vmem:[#allocation2 + $0x8] sm:$0xff]
      %v318 = vld [vmem:[#allocation2 + $0x10] sm:$0xff]
      %v319 = vld [vmem:[#allocation2 + $0x18] sm:$0xff]
      %v320 = vld [vmem:[%s1] sm:$0xff]
      %v321 = vld [vmem:[%s1 + $0x8] sm:$0xff]
      %v322 = vld [vmem:[%s1 + $0x10] sm:$0xff]
      %v323 = vld [vmem:[%s1 + $0x18] sm:$0xff]
      %v324 = vld [vmem:[%s1 + $0x20] sm:$0xff]
      %v325 = vld [vmem:[%s1 + $0x28] sm:$0xff]
      %v326 = vld [vmem:[%s1 + $0x30] sm:$0xff]
      %v327 = vld [vmem:[%s1 + $0x38] sm:$0xff]
      %v328 = vld [vmem:[%s1 + $0x40] sm:$0xff]
      %v329 = vld [vmem:[%s1 + $0x48] sm:$0xff]
      %v330 = vld [vmem:[%s1 + $0x50] sm:$0xff]
      %v331 = vld [vmem:[%s1 + $0x58] sm:$0xff]
      %v332 = vld [vmem:[%s1 + $0x60] sm:$0xff]
      %v333 = vld [vmem:[%s1 + $0x68] sm:$0xff]
      %v334 = vld [vmem:[%s1 + $0x70] sm:$0xff]
      %v335 = vld [vmem:[%s1 + $0x78] sm:$0xff]
      %v336 = vld [vmem:[%s1 + $0x80] sm:$0xff]
      %v337 = vld [vmem:[%s1 + $0x88] sm:$0xff]
      %v338 = vld [vmem:[#allocation2] sm:$0xfe]
      %v339 = vld [vmem:[#allocation2 + $0x8] sm:$0xfe]
      %v340 = vld [vmem:[#allocation2 + $0x20] sm:$0x1]
      %v341 = vld [vmem:[#allocation2 + $0x28] sm:$0x1]
      %s342 = scalar_lea.vmem %s1, 144
      %v343 = vld [vmem:[%s342] sm:$0xff]
      %v344 = vld [vmem:[%s342 + $0x8] sm:$0xff]
      %v345 = vld [vmem:[%s342 + $0x10] sm:$0xff]
      %v346 = vld [vmem:[%s342 + $0x18] sm:$0xff]
      %v347 = vld [vmem:[%s342 + $0x20] sm:$0xff]
      %v348 = vld [vmem:[%s342 + $0x28] sm:$0xff]
      %v349 = vld [vmem:[%s342 + $0x30] sm:$0xff]
      %v350 = vld [vmem:[%s342 + $0x38] sm:$0xff]
      %v351 = vld [vmem:[%s342 + $0x40] sm:$0xff]
      %v352 = vld [vmem:[%s342 + $0x48] sm:$0xff]
      %v353 = vld [vmem:[%s342 + $0x50] sm:$0xff]
      %v354 = vld [vmem:[%s342 + $0x58] sm:$0xff]
      %v355 = vld [vmem:[%s342 + $0x60] sm:$0xff]
      %v356 = vld [vmem:[%s342 + $0x68] sm:$0xff]
      %v357 = vld [vmem:[%s342 + $0x70] sm:$0xff]
      %v358 = vld [vmem:[%s342 + $0x78] sm:$0xff]
      %v359 = vld [vmem:[%s342 + $0x80] sm:$0xff]
      %v360 = vld [vmem:[%s342 + $0x88] sm:$0xff]
      %vm367 = vcmask 1046528
      %v368 = vrot.slane %v338, 1
      %v369 = vrot.slane %v318, 1
      %v370 = vsel %vm367, %v368, %v369
      %v371 = vrot.slane %v339, 1
      %v372 = vrot.slane %v319, 1
      %v373 = vsel %vm367, %v371, %v372
      %v374 = vrot.slane %v340, 1
      %v375 = vsel %vm367, %v369, %v374
      %v376 = vrot.slane %v341, 1
      %v377 = vsel %vm367, %v372, %v376
      %v380 = vsel %vm282, %v373, 0
      %v382 = vsel %vm282, %v377, 0
      %384 = vmatprep.subr.mxu0 0.0
      %385 = vmatpush1.msra.mxu0 %v343
      %386 = vmatprep.subr.mxu0 0.0
      %387 = vmatpush1.msra.mxu0 %v344
      %388 = vmatprep.subr.mxu0 0.0
      %389 = vmatpush1.msra.mxu0 %v345
      %390 = vmatprep.subr.mxu0 0.0
      %391 = vmatpush1.msra.mxu0 %v346
      %392 = vmatprep.subr.mxu0 0.0
      %393 = vmatpush1.msra.mxu0 %v347
      %394 = vmatprep.subr.mxu0 0.0
      %395 = vmatpush1.msra.mxu0 %v348
      %396 = vmatprep.subr.mxu0 0.0
      %397 = vmatpush1.msra.mxu0 %v349
      %398 = vmatprep.subr.mxu0 0.0
      %399 = vmatpush1.msra.mxu0 %v350
      %400 = vmatprep.subr.mxu0 0.0
      %401 = vmatpush1.msra.mxu0 %v351
      %402 = vmatprep.subr.mxu0 0.0
      %403 = vmatpush1.msra.mxu0 %v352
      %404 = vmatprep.subr.mxu0 0.0
      %405 = vmatpush1.msra.mxu0 %v353
      %406 = vmatprep.subr.mxu0 0.0
      %407 = vmatpush1.msra.mxu0 %v354
      %408 = vmatprep.subr.mxu0 0.0
      %409 = vmatpush1.msra.mxu0 %v355
      %410 = vmatprep.subr.mxu0 0.0
      %411 = vmatpush1.msra.mxu0 %v356
      %412 = vmatprep.subr.mxu0 0.0
      %413 = vmatpush1.msra.mxu0 %v357
      %414 = vmatprep.subr.mxu0 0.0
      %415 = vmatpush1.msra.mxu0 %v358
      %416 = vmatprep.subr.mxu0 0.0
      %417 = vmatpush1.msra.mxu0 %v359
      %418 = vmatprep.subr.mxu0 0.0
      %419 = vmatpush1.msra.mxu0 %v360
      %420 = vmatprep.subr.mxu0 0.0
      %421 = vmatpush1.msra.mxu0 0.0
      %422 = vmatprep.subr.mxu0 0.0
      %423 = vmatpush1.msra.mxu0 0.0
      %424 = vmatprep.subr.mxu0 0.0
      %425 = vmatpush1.msra.mxu0 0.0
      %426 = vmatprep.subr.mxu0 0.0
      %427 = vmatpush1.msra.mxu0 0.0
      %428 = vmatprep.subr.mxu0 0.0
      %429 = vmatpush1.msra.mxu0 0.0
      %430 = vmatprep.subr.mxu0 0.0
      %431 = vmatpush1.msra.mxu0 0.0
      %432 = vmatprep.subr.mxu0 0.0
      %433 = vmatpush1.msra.mxu0 0.0
      %434 = vmatprep.subr.mxu0 0.0
      %435 = vmatpush1.msra.mxu0 0.0
      %436 = vmatprep.subr.mxu0 0.0
      %437 = vmatpush1.msra.mxu0 0.0
      %438 = vmatprep.subr.mxu0 0.0
      %439 = vmatpush1.msra.mxu0 0.0
      %440 = vmatprep.subr.mxu0 0.0
      %441 = vmatpush1.msra.mxu0 0.0
      %442 = vmatprep.subr.mxu0 0.0
      %443 = vmatpush1.msra.mxu0 0.0
      %444 = vmatprep.subr.mxu0 0.0
      %445 = vmatpush1.msra.mxu0 0.0
      %446 = vmatprep.subr.mxu0 0.0
      %447 = vmatpush1.msra.mxu0 0.0
      %448 = vmatprep.mubr.f32.mxu0 %v380
      %449 = vmatmul.mubr.f32.gmra.mrb[0].mxu0 %v370
      %v450 = vpop.f32.mrb[0].mxu0
      %v451 = vadd.f32 0.0, %v450
      %v452 = vpop.f32.mrb[0].mxu0
      %453 = vmatprep.mubr.f32.mxu0 %v382
      %454 = vmatmul.mubr.f32.gmra.mrb[0].mxu0 %v375
      %v455 = vpop.f32.mrb[0].mxu0
      %v456 = vadd.f32 0.0, %v455
      %v457 = vpop.f32.mrb[0].mxu0
      %458 = vdwg.mxu0
      %v460 = vsel %vm282, %v317, 0
      %v462 = vsel %vm282, %v319, 0
      %464 = vmatprep.subr.mxu0 0.0
      %465 = vmatpush1.msra.mxu0 %v320
      %466 = vmatprep.subr.mxu0 0.0
      %467 = vmatpush1.msra.mxu0 %v321
      %468 = vmatprep.subr.mxu0 0.0
      %469 = vmatpush1.msra.mxu0 %v322
      %470 = vmatprep.subr.mxu0 0.0
      %471 = vmatpush1.msra.mxu0 %v323
      %472 = vmatprep.subr.mxu0 0.0
      %473 = vmatpush1.msra.mxu0 %v324
      %474 = vmatprep.subr.mxu0 0.0
      %475 = vmatpush1.msra.mxu0 %v325
      %476 = vmatprep.subr.mxu0 0.0
      %477 = vmatpush1.msra.mxu0 %v326
      %478 = vmatprep.subr.mxu0 0.0
      %479 = vmatpush1.msra.mxu0 %v327
      %480 = vmatprep.subr.mxu0 0.0
      %481 = vmatpush1.msra.mxu0 %v328
      %482 = vmatprep.subr.mxu0 0.0
      %483 = vmatpush1.msra.mxu0 %v329
      %484 = vmatprep.subr.mxu0 0.0
      %485 = vmatpush1.msra.mxu0 %v330
      %486 = vmatprep.subr.mxu0 0.0
      %487 = vmatpush1.msra.mxu0 %v331
      %488 = vmatprep.subr.mxu0 0.0
      %489 = vmatpush1.msra.mxu0 %v332
      %490 = vmatprep.subr.mxu0 0.0
      %491 = vmatpush1.msra.mxu0 %v333
      %492 = vmatprep.subr.mxu0 0.0
      %493 = vmatpush1.msra.mxu0 %v334
      %494 = vmatprep.subr.mxu0 0.0
      %495 = vmatpush1.msra.mxu0 %v335
      %496 = vmatprep.subr.mxu0 0.0
      %497 = vmatpush1.msra.mxu0 %v336
      %498 = vmatprep.subr.mxu0 0.0
      %499 = vmatpush1.msra.mxu0 %v337
      %500 = vmatprep.subr.mxu0 0.0
      %501 = vmatpush1.msra.mxu0 0.0
      %502 = vmatprep.subr.mxu0 0.0
      %503 = vmatpush1.msra.mxu0 0.0
      %504 = vmatprep.subr.mxu0 0.0
      %505 = vmatpush1.msra.mxu0 0.0
      %506 = vmatprep.subr.mxu0 0.0
      %507 = vmatpush1.msra.mxu0 0.0
      %508 = vmatprep.subr.mxu0 0.0
      %509 = vmatpush1.msra.mxu0 0.0
      %510 = vmatprep.subr.mxu0 0.0
      %511 = vmatpush1.msra.mxu0 0.0
      %512 = vmatprep.subr.mxu0 0.0
      %513 = vmatpush1.msra.mxu0 0.0
      %514 = vmatprep.subr.mxu0 0.0
      %515 = vmatpush1.msra.mxu0 0.0
      %516 = vmatprep.subr.mxu0 0.0
      %517 = vmatpush1.msra.mxu0 0.0
      %518 = vmatprep.subr.mxu0 0.0
      %519 = vmatpush1.msra.mxu0 0.0
      %520 = vmatprep.subr.mxu0 0.0
      %521 = vmatpush1.msra.mxu0 0.0
      %522 = vmatprep.subr.mxu0 0.0
      %523 = vmatpush1.msra.mxu0 0.0
      %524 = vmatprep.subr.mxu0 0.0
      %525 = vmatpush1.msra.mxu0 0.0
      %526 = vmatprep.subr.mxu0 0.0
      %527 = vmatpush1.msra.mxu0 0.0
      %528 = vmatprep.mubr.f32.mxu0 %v460
      %529 = vmatmul.mubr.f32.gmra.mrb[0].mxu0 %v316
      %v530 = vpop.f32.mrb[0].mxu0
      %v531 = vadd.f32 %v451, %v530
      %v532 = vpop.f32.mrb[0].mxu0
      %533 = vmatprep.mubr.f32.mxu0 %v462
      %534 = vmatmul.mubr.f32.gmra.mrb[0].mxu0 %v318
      %v535 = vpop.f32.mrb[0].mxu0
      %v536 = vadd.f32 %v456, %v535
      %v537 = vpop.f32.mrb[0].mxu0
      %538 = vdwg.mxu0
      %v539 = vld [vmem:[#allocation2] sm:$0xfc]
      %v540 = vld [vmem:[#allocation2 + $0x8] sm:$0xfc]
      %v541 = vld [vmem:[#allocation2 + $0x20] sm:$0x3]
      %v542 = vld [vmem:[#allocation2 + $0x28] sm:$0x3]
      %s543 = scalar_lea.vmem %s1, 288
      %v544 = vld [vmem:[%s543] sm:$0xff]
      %v545 = vld [vmem:[%s543 + $0x8] sm:$0xff]
      %v546 = vld [vmem:[%s543 + $0x10] sm:$0xff]
      %v547 = vld [vmem:[%s543 + $0x18] sm:$0xff]
      %v548 = vld [vmem:[%s543 + $0x20] sm:$0xff]
      %v549 = vld [vmem:[%s543 + $0x28] sm:$0xff]
      %v550 = vld [vmem:[%s543 + $0x30] sm:$0xff]
      %v551 = vld [vmem:[%s543 + $0x38] sm:$0xff]
      %v552 = vld [vmem:[%s543 + $0x40] sm:$0xff]
      %v553 = vld [vmem:[%s543 + $0x48] sm:$0xff]
      %v554 = vld [vmem:[%s543 + $0x50] sm:$0xff]
      %v555 = vld [vmem:[%s543 + $0x58] sm:$0xff]
      %v556 = vld [vmem:[%s543 + $0x60] sm:$0xff]
      %v557 = vld [vmem:[%s543 + $0x68] sm:$0xff]
      %v558 = vld [vmem:[%s543 + $0x70] sm:$0xff]
      %v559 = vld [vmem:[%s543 + $0x78] sm:$0xff]
      %v560 = vld [vmem:[%s543 + $0x80] sm:$0xff]
      %v561 = vld [vmem:[%s543 + $0x88] sm:$0xff]
      %vm566 = vcmask 1045504
      %v567 = vrot.slane %v539, 2
      %v568 = vrot.slane %v318, 2
      %v569 = vsel %vm566, %v567, %v568
      %v570 = vrot.slane %v540, 2
      %v571 = vrot.slane %v319, 2
      %v572 = vsel %vm566, %v570, %v571
      %v573 = vrot.slane %v541, 2
      %v574 = vsel %vm566, %v568, %v573
      %v575 = vrot.slane %v542, 2
      %v576 = vsel %vm566, %v571, %v575
      %v579 = vsel %vm282, %v572, 0
      %v581 = vsel %vm282, %v576, 0
      %583 = vmatprep.subr.mxu0 0.0
      %584 = vmatpush1.msra.mxu0 %v544
      %585 = vmatprep.subr.mxu0 0.0
      %586 = vmatpush1.msra.mxu0 %v545
      %587 = vmatprep.subr.mxu0 0.0
      %588 = vmatpush1.msra.mxu0 %v546
      %589 = vmatprep.subr.mxu0 0.0
      %590 = vmatpush1.msra.mxu0 %v547
      %591 = vmatprep.subr.mxu0 0.0
      %592 = vmatpush1.msra.mxu0 %v548
      %593 = vmatprep.subr.mxu0 0.0
      %594 = vmatpush1.msra.mxu0 %v549
      %595 = vmatprep.subr.mxu0 0.0
      %596 = vmatpush1.msra.mxu0 %v550
      %597 = vmatprep.subr.mxu0 0.0
      %598 = vmatpush1.msra.mxu0 %v551
      %599 = vmatprep.subr.mxu0 0.0
      %600 = vmatpush1.msra.mxu0 %v552
      %601 = vmatprep.subr.mxu0 0.0
      %602 = vmatpush1.msra.mxu0 %v553
      %603 = vmatprep.subr.mxu0 0.0
      %604 = vmatpush1.msra.mxu0 %v554
      %605 = vmatprep.subr.mxu0 0.0
      %606 = vmatpush1.msra.mxu0 %v555
      %607 = vmatprep.subr.mxu0 0.0
      %608 = vmatpush1.msra.mxu0 %v556
      %609 = vmatprep.subr.mxu0 0.0
      %610 = vmatpush1.msra.mxu0 %v557
      %611 = vmatprep.subr.mxu0 0.0
      %612 = vmatpush1.msra.mxu0 %v558
      %613 = vmatprep.subr.mxu0 0.0
      %614 = vmatpush1.msra.mxu0 %v559
      %615 = vmatprep.subr.mxu0 0.0
      %616 = vmatpush1.msra.mxu0 %v560
      %617 = vmatprep.subr.mxu0 0.0
      %618 = vmatpush1.msra.mxu0 %v561
      %619 = vmatprep.subr.mxu0 0.0
      %620 = vmatpush1.msra.mxu0 0.0
      %621 = vmatprep.subr.mxu0 0.0
      %622 = vmatpush1.msra.mxu0 0.0
      %623 = vmatprep.subr.mxu0 0.0
      %624 = vmatpush1.msra.mxu0 0.0
      %625 = vmatprep.subr.mxu0 0.0
      %626 = vmatpush1.msra.mxu0 0.0
      %627 = vmatprep.subr.mxu0 0.0
      %628 = vmatpush1.msra.mxu0 0.0
      %629 = vmatprep.subr.mxu0 0.0
      %630 = vmatpush1.msra.mxu0 0.0
      %631 = vmatprep.subr.mxu0 0.0
      %632 = vmatpush1.msra.mxu0 0.0
      %633 = vmatprep.subr.mxu0 0.0
      %634 = vmatpush1.msra.mxu0 0.0
      %635 = vmatprep.subr.mxu0 0.0
      %636 = vmatpush1.msra.mxu0 0.0
      %637 = vmatprep.subr.mxu0 0.0
      %638 = vmatpush1.msra.mxu0 0.0
      %639 = vmatprep.subr.mxu0 0.0
      %640 = vmatpush1.msra.mxu0 0.0
      %641 = vmatprep.subr.mxu0 0.0
      %642 = vmatpush1.msra.mxu0 0.0
      %643 = vmatprep.subr.mxu0 0.0
      %644 = vmatpush1.msra.mxu0 0.0
      %645 = vmatprep.subr.mxu0 0.0
      %646 = vmatpush1.msra.mxu0 0.0
      %647 = vmatprep.mubr.f32.mxu0 %v579
      %648 = vmatmul.mubr.f32.gmra.mrb[0].mxu0 %v569
      %v649 = vpop.f32.mrb[0].mxu0
      %v650 = vadd.f32 0.0, %v649
      %v651 = vpop.f32.mrb[0].mxu0
      %652 = vmatprep.mubr.f32.mxu0 %v581
      %653 = vmatmul.mubr.f32.gmra.mrb[0].mxu0 %v574
      %v654 = vpop.f32.mrb[0].mxu0
      %v655 = vadd.f32 0.0, %v654
      %v656 = vpop.f32.mrb[0].mxu0
      %657 = vdwg.mxu0
      %v658 = vadd.f32 %v531, %v650
      %v659 = vadd.f32 %v536, %v655
      %v660 = vld [vmem:[%s2] sm:$0x1]
      %v662 = vlaneseq
      %v663 = vshrl.u32 %v662, 7
      %v664 = vsub.s32 0, %v663
      %v665 = vrot.slane %v660, %v664
      %v667 = vmul.f32 %v658, %v665
      %v668 = vmul.f32 %v659, %v665
      %v669 = vld [vmem:[%s3] sm:$0x1]
      %v671 = vlaneseq
      %v672 = vshrl.u32 %v671, 7
      %v673 = vsub.s32 0, %v672
      %v674 = vrot.slane %v669, %v673
      %v676 = vadd.f32 %v667, %v674
      %v677 = vadd.f32 %v668, %v674
      %v678 = vmax.f32 %v676, 0.0
      %v679 = vmax.f32 %v677, 0.0
      %v682 = vrot.slane %v678, 7
      %v683 = vrot.slane %v679, 7
      %v684 = vsel %vm291, %v682, %v683
      %685 = vrot.lane.b32.xlu0 %v682, 8
      %v686 = vpop.permute.xlu0 %685
      %687 = vrot.lane.b32.xlu0 %v684, 8
      %v688 = vpop.permute.xlu0 %687
      %689 = vrot.lane.b32.xlu0 %v683, 8
      %v690 = vpop.permute.xlu0 %689
      %694 = vst.msk [vmem:[#allocation2] sm:$0xfe] %vm304, %v686
      %695 = vst.msk [vmem:[#allocation2 + $0x8] sm:$0xfe] %vm306, %v686
      %696 = vst.msk [vmem:[#allocation2 + $0x10] sm:$0xff] %vm308, %v688
      %697 = vst.msk [vmem:[#allocation2 + $0x18] sm:$0xff] %vm310, %v688
      %698 = vst.msk [vmem:[#allocation2 + $0x20] sm:$0x1] %vm312, %v690
      %699 = vst.msk [vmem:[#allocation2 + $0x28] sm:$0x1] %vm314, %v690
      %v700 = vld [vmem:[#allocation2] sm:$0xff]
      %v701 = vld [vmem:[#allocation2 + $0x8] sm:$0xff]
      %v702 = vld [vmem:[#allocation2 + $0x10] sm:$0xff]
      %v703 = vld [vmem:[#allocation2 + $0x18] sm:$0xff]
      %v704 = vld [vmem:[%s4] sm:$0xff]
      %v705 = vld [vmem:[%s4 + $0x8] sm:$0xff]
      %v706 = vld [vmem:[%s4 + $0x10] sm:$0xff]
      %v707 = vld [vmem:[%s4 + $0x18] sm:$0xff]
      %v708 = vld [vmem:[%s4 + $0x20] sm:$0xff]
      %v709 = vld [vmem:[%s4 + $0x28] sm:$0xff]
      %v710 = vld [vmem:[%s4 + $0x30] sm:$0xff]
      %v711 = vld [vmem:[%s4 + $0x38] sm:$0xff]
      %v712 = vld [vmem:[%s4 + $0x40] sm:$0xff]
      %v713 = vld [vmem:[%s4 + $0x48] sm:$0xff]
      %v714 = vld [vmem:[%s4 + $0x50] sm:$0xff]
      %v715 = vld [vmem:[%s4 + $0x58] sm:$0xff]
      %v716 = vld [vmem:[%s4 + $0x60] sm:$0xff]
      %v717 = vld [vmem:[%s4 + $0x68] sm:$0xff]
      %v718 = vld [vmem:[%s4 + $0x70] sm:$0xff]
      %v719 = vld [vmem:[%s4 + $0x78] sm:$0xff]
      %v720 = vld [vmem:[%s4 + $0x80] sm:$0xff]
      %v721 = vld [vmem:[%s4 + $0x88] sm:$0xff]
      %v722 = vld [vmem:[#allocation2] sm:$0xfe]
      %v723 = vld [vmem:[#allocation2 + $0x8] sm:$0xfe]
      %v724 = vld [vmem:[#allocation2 + $0x20] sm:$0x1]
      %v725 = vld [vmem:[#allocation2 + $0x28] sm:$0x1]
      %s726 = scalar_lea.vmem %s4, 144
      %v727 = vld [vmem:[%s726] sm:$0xff]
      %v728 = vld [vmem:[%s726 + $0x8] sm:$0xff]
      %v729 = vld [vmem:[%s726 + $0x10] sm:$0xff]
      %v730 = vld [vmem:[%s726 + $0x18] sm:$0xff]
      %v731 = vld [vmem:[%s726 + $0x20] sm:$0xff]
      %v732 = vld [vmem:[%s726 + $0x28] sm:$0xff]
      %v733 = vld [vmem:[%s726 + $0x30] sm:$0xff]
      %v734 = vld [vmem:[%s726 + $0x38] sm:$0xff]
      %v735 = vld [vmem:[%s726 + $0x40] sm:$0xff]
      %v736 = vld [vmem:[%s726 + $0x48] sm:$0xff]
      %v737 = vld [vmem:[%s726 + $0x50] sm:$0xff]
      %v738 = vld [vmem:[%s726 + $0x58] sm:$0xff]
      %v739 = vld [vmem:[%s726 + $0x60] sm:$0xff]
      %v740 = vld [vmem:[%s726 + $0x68] sm:$0xff]
      %v741 = vld [vmem:[%s726 + $0x70] sm:$0xff]
      %v742 = vld [vmem:[%s726 + $0x78] sm:$0xff]
      %v743 = vld [vmem:[%s726 + $0x80] sm:$0xff]
      %v744 = vld [vmem:[%s726 + $0x88] sm:$0xff]
      %v751 = vrot.slane %v722, 1
      %v752 = vrot.slane %v702, 1
      %v753 = vsel %vm367, %v751, %v752
      %v754 = vrot.slane %v723, 1
      %v755 = vrot.slane %v703, 1
      %v756 = vsel %vm367, %v754, %v755
      %v757 = vrot.slane %v724, 1
      %v758 = vsel %vm367, %v752, %v757
      %v759 = vrot.slane %v725, 1
      %v760 = vsel %vm367, %v755, %v759
      %v763 = vsel %vm282, %v756, 0
      %v765 = vsel %vm282, %v760, 0
      %767 = vmatprep.subr.mxu0 0.0
      %768 = vmatpush1.msra.mxu0 %v727
      %769 = vmatprep.subr.mxu0 0.0
      %770 = vmatpush1.msra.mxu0 %v728
      %771 = vmatprep.subr.mxu0 0.0
      %772 = vmatpush1.msra.mxu0 %v729
      %773 = vmatprep.subr.mxu0 0.0
      %774 = vmatpush1.msra.mxu0 %v730
      %775 = vmatprep.subr.mxu0 0.0
      %776 = vmatpush1.msra.mxu0 %v731
      %777 = vmatprep.subr.mxu0 0.0
      %778 = vmatpush1.msra.mxu0 %v732
      %779 = vmatprep.subr.mxu0 0.0
      %780 = vmatpush1.msra.mxu0 %v733
      %781 = vmatprep.subr.mxu0 0.0
      %782 = vmatpush1.msra.mxu0 %v734
      %783 = vmatprep.subr.mxu0 0.0
      %784 = vmatpush1.msra.mxu0 %v735
      %785 = vmatprep.subr.mxu0 0.0
      %786 = vmatpush1.msra.mxu0 %v736
      %787 = vmatprep.subr.mxu0 0.0
      %788 = vmatpush1.msra.mxu0 %v737
      %789 = vmatprep.subr.mxu0 0.0
      %790 = vmatpush1.msra.mxu0 %v738
      %791 = vmatprep.subr.mxu0 0.0
      %792 = vmatpush1.msra.mxu0 %v739
      %793 = vmatprep.subr.mxu0 0.0
      %794 = vmatpush1.msra.mxu0 %v740
      %795 = vmatprep.subr.mxu0 0.0
      %796 = vmatpush1.msra.mxu0 %v741
      %797 = vmatprep.subr.mxu0 0.0
      %798 = vmatpush1.msra.mxu0 %v742
      %799 = vmatprep.subr.mxu0 0.0
      %800 = vmatpush1.msra.mxu0 %v743
      %801 = vmatprep.subr.mxu0 0.0
      %802 = vmatpush1.msra.mxu0 %v744
      %803 = vmatprep.subr.mxu0 0.0
      %804 = vmatpush1.msra.mxu0 0.0
      %805 = vmatprep.subr.mxu0 0.0
      %806 = vmatpush1.msra.mxu0 0.0
      %807 = vmatprep.subr.mxu0 0.0
      %808 = vmatpush1.msra.mxu0 0.0
      %809 = vmatprep.subr.mxu0 0.0
      %810 = vmatpush1.msra.mxu0 0.0
      %811 = vmatprep.subr.mxu0 0.0
      %812 = vmatpush1.msra.mxu0 0.0
      %813 = vmatprep.subr.mxu0 0.0
      %814 = vmatpush1.msra.mxu0 0.0
      %815 = vmatprep.subr.mxu0 0.0
      %816 = vmatpush1.msra.mxu0 0.0
      %817 = vmatprep.subr.mxu0 0.0
      %818 = vmatpush1.msra.mxu0 0.0
      %819 = vmatprep.subr.mxu0 0.0
      %820 = vmatpush1.msra.mxu0 0.0
      %821 = vmatprep.subr.mxu0 0.0
      %822 = vmatpush1.msra.mxu0 0.0
      %823 = vmatprep.subr.mxu0 0.0
      %824 = vmatpush1.msra.mxu0 0.0
      %825 = vmatprep.subr.mxu0 0.0
      %826 = vmatpush1.msra.mxu0 0.0
      %827 = vmatprep.subr.mxu0 0.0
      %828 = vmatpush1.msra.mxu0 0.0
      %829 = vmatprep.subr.mxu0 0.0
      %830 = vmatpush1.msra.mxu0 0.0
      %831 = vmatprep.mubr.f32.mxu0 %v763
      %832 = vmatmul.mubr.f32.gmra.mrb[0].mxu0 %v753
      %v833 = vpop.f32.mrb[0].mxu0
      %v834 = vadd.f32 0.0, %v833
      %v835 = vpop.f32.mrb[0].mxu0
      %836 = vmatprep.mubr.f32.mxu0 %v765
      %837 = vmatmul.mubr.f32.gmra.mrb[0].mxu0 %v758
      %v838 = vpop.f32.mrb[0].mxu0
      %v839 = vadd.f32 0.0, %v838
      %v840 = vpop.f32.mrb[0].mxu0
      %841 = vdwg.mxu0
      %v843 = vsel %vm282, %v701, 0
      %v845 = vsel %vm282, %v703, 0
      %847 = vmatprep.subr.mxu0 0.0
      %848 = vmatpush1.msra.mxu0 %v704
      %849 = vmatprep.subr.mxu0 0.0
      %850 = vmatpush1.msra.mxu0 %v705
      %851 = vmatprep.subr.mxu0 0.0
      %852 = vmatpush1.msra.mxu0 %v706
      %853 = vmatprep.subr.mxu0 0.0
      %854 = vmatpush1.msra.mxu0 %v707
      %855 = vmatprep.subr.mxu0 0.0
      %856 = vmatpush1.msra.mxu0 %v708
      %857 = vmatprep.subr.mxu0 0.0
      %858 = vmatpush1.msra.mxu0 %v709
      %859 = vmatprep.subr.mxu0 0.0
      %860 = vmatpush1.msra.mxu0 %v710
      %861 = vmatprep.subr.mxu0 0.0
      %862 = vmatpush1.msra.mxu0 %v711
      %863 = vmatprep.subr.mxu0 0.0
      %864 = vmatpush1.msra.mxu0 %v712
      %865 = vmatprep.subr.mxu0 0.0
      %866 = vmatpush1.msra.mxu0 %v713
      %867 = vmatprep.subr.mxu0 0.0
      %868 = vmatpush1.msra.mxu0 %v714
      %869 = vmatprep.subr.mxu0 0.0
      %870 = vmatpush1.msra.mxu0 %v715
      %871 = vmatprep.subr.mxu0 0.0
      %872 = vmatpush1.msra.mxu0 %v716
      %873 = vmatprep.subr.mxu0 0.0
      %874 = vmatpush1.msra.mxu0 %v717
      %875 = vmatprep.subr.mxu0 0.0
      %876 = vmatpush1.msra.mxu0 %v718
      %877 = vmatprep.subr.mxu0 0.0
      %878 = vmatpush1.msra.mxu0 %v719
      %879 = vmatprep.subr.mxu0 0.0
      %880 = vmatpush1.msra.mxu0 %v720
      %881 = vmatprep.subr.mxu0 0.0
      %882 = vmatpush1.msra.mxu0 %v721
      %883 = vmatprep.subr.mxu0 0.0
      %884 = vmatpush1.msra.mxu0 0.0
      %885 = vmatprep.subr.mxu0 0.0
      %886 = vmatpush1.msra.mxu0 0.0
      %887 = vmatprep.subr.mxu0 0.0
      %888 = vmatpush1.msra.mxu0 0.0
      %889 = vmatprep.subr.mxu0 0.0
      %890 = vmatpush1.msra.mxu0 0.0
      %891 = vmatprep.subr.mxu0 0.0
      %892 = vmatpush1.msra.mxu0 0.0
      %893 = vmatprep.subr.mxu0 0.0
      %894 = vmatpush1.msra.mxu0 0.0
      %895 = vmatprep.subr.mxu0 0.0
      %896 = vmatpush1.msra.mxu0 0.0
      %897 = vmatprep.subr.mxu0 0.0
      %898 = vmatpush1.msra.mxu0 0.0
      %899 = vmatprep.subr.mxu0 0.0
      %900 = vmatpush1.msra.mxu0 0.0
      %901 = vmatprep.subr.mxu0 0.0
      %902 = vmatpush1.msra.mxu0 0.0
      %903 = vmatprep.subr.mxu0 0.0
      %904 = vmatpush1.msra.mxu0 0.0
      %905 = vmatprep.subr.mxu0 0.0
      %906 = vmatpush1.msra.mxu0 0.0
      %907 = vmatprep.subr.mxu0 0.0
      %908 = vmatpush1.msra.mxu0 0.0
      %909 = vmatprep.subr.mxu0 0.0
      %910 = vmatpush1.msra.mxu0 0.0
      %911 = vmatprep.mubr.f32.mxu0 %v843
      %912 = vmatmul.mubr.f32.gmra.mrb[0].mxu0 %v700
      %v913 = vpop.f32.mrb[0].mxu0
      %v914 = vadd.f32 %v834, %v913
      %v915 = vpop.f32.mrb[0].mxu0
      %916 = vmatprep.mubr.f32.mxu0 %v845
      %917 = vmatmul.mubr.f32.gmra.mrb[0].mxu0 %v702
      %v918 = vpop.f32.mrb[0].mxu0
      %v919 = vadd.f32 %v839, %v918
      %v920 = vpop.f32.mrb[0].mxu0
      %921 = vdwg.mxu0
      %v922 = vld [vmem:[#allocation2] sm:$0xfc]
      %v923 = vld [vmem:[#allocation2 + $0x8] sm:$0xfc]
      %v924 = vld [vmem:[#allocation2 + $0x20] sm:$0x3]
      %v925 = vld [vmem:[#allocation2 + $0x28] sm:$0x3]
      %s926 = scalar_lea.vmem %s4, 288
      %v927 = vld [vmem:[%s926] sm:$0xff]
      %v928 = vld [vmem:[%s926 + $0x8] sm:$0xff]
      %v929 = vld [vmem:[%s926 + $0x10] sm:$0xff]
      %v930 = vld [vmem:[%s926 + $0x18] sm:$0xff]
      %v931 = vld [vmem:[%s926 + $0x20] sm:$0xff]
      %v932 = vld [vmem:[%s926 + $0x28] sm:$0xff]
      %v933 = vld [vmem:[%s926 + $0x30] sm:$0xff]
      %v934 = vld [vmem:[%s926 + $0x38] sm:$0xff]
      %v935 = vld [vmem:[%s926 + $0x40] sm:$0xff]
      %v936 = vld [vmem:[%s926 + $0x48] sm:$0xff]
      %v937 = vld [vmem:[%s926 + $0x50] sm:$0xff]
      %v938 = vld [vmem:[%s926 + $0x58] sm:$0xff]
      %v939 = vld [vmem:[%s926 + $0x60] sm:$0xff]
      %v940 = vld [vmem:[%s926 + $0x68] sm:$0xff]
      %v941 = vld [vmem:[%s926 + $0x70] sm:$0xff]
      %v942 = vld [vmem:[%s926 + $0x78] sm:$0xff]
      %v943 = vld [vmem:[%s926 + $0x80] sm:$0xff]
      %v944 = vld [vmem:[%s926 + $0x88] sm:$0xff]
      %v949 = vrot.slane %v922, 2
      %v950 = vrot.slane %v702, 2
      %v951 = vsel %vm566, %v949, %v950
      %v952 = vrot.slane %v923, 2
      %v953 = vrot.slane %v703, 2
      %v954 = vsel %vm566, %v952, %v953
      %v955 = vrot.slane %v924, 2
      %v956 = vsel %vm566, %v950, %v955
      %v957 = vrot.slane %v925, 2
      %v958 = vsel %vm566, %v953, %v957
      %v961 = vsel %vm282, %v954, 0
      %v963 = vsel %vm282, %v958, 0
      %965 = vmatprep.subr.mxu0 0.0
      %966 = vmatpush1.msra.mxu0 %v927
      %967 = vmatprep.subr.mxu0 0.0
      %968 = vmatpush1.msra.mxu0 %v928
      %969 = vmatprep.subr.mxu0 0.0
      %970 = vmatpush1.msra.mxu0 %v929
      %971 = vmatprep.subr.mxu0 0.0
      %972 = vmatpush1.msra.mxu0 %v930
      %973 = vmatprep.subr.mxu0 0.0
      %974 = vmatpush1.msra.mxu0 %v931
      %975 = vmatprep.subr.mxu0 0.0
      %976 = vmatpush1.msra.mxu0 %v932
      %977 = vmatprep.subr.mxu0 0.0
      %978 = vmatpush1.msra.mxu0 %v933
      %979 = vmatprep.subr.mxu0 0.0
      %980 = vmatpush1.msra.mxu0 %v934
      %981 = vmatprep.subr.mxu0 0.0
      %982 = vmatpush1.msra.mxu0 %v935
      %983 = vmatprep.subr.mxu0 0.0
      %984 = vmatpush1.msra.mxu0 %v936
      %985 = vmatprep.subr.mxu0 0.0
      %986 = vmatpush1.msra.mxu0 %v937
      %987 = vmatprep.subr.mxu0 0.0
      %988 = vmatpush1.msra.mxu0 %v938
      %989 = vmatprep.subr.mxu0 0.0
      %990 = vmatpush1.msra.mxu0 %v939
      %991 = vmatprep.subr.mxu0 0.0
      %992 = vmatpush1.msra.mxu0 %v940
      %993 = vmatprep.subr.mxu0 0.0
      %994 = vmatpush1.msra.mxu0 %v941
      %995 = vmatprep.subr.mxu0 0.0
      %996 = vmatpush1.msra.mxu0 %v942
      %997 = vmatprep.subr.mxu0 0.0
      %998 = vmatpush1.msra.mxu0 %v943
      %999 = vmatprep.subr.mxu0 0.0
      %1000 = vmatpush1.msra.mxu0 %v944
      %1001 = vmatprep.subr.mxu0 0.0
      %1002 = vmatpush1.msra.mxu0 0.0
      %1003 = vmatprep.subr.mxu0 0.0
      %1004 = vmatpush1.msra.mxu0 0.0
      %1005 = vmatprep.subr.mxu0 0.0
      %1006 = vmatpush1.msra.mxu0 0.0
      %1007 = vmatprep.subr.mxu0 0.0
      %1008 = vmatpush1.msra.mxu0 0.0
      %1009 = vmatprep.subr.mxu0 0.0
      %1010 = vmatpush1.msra.mxu0 0.0
      %1011 = vmatprep.subr.mxu0 0.0
      %1012 = vmatpush1.msra.mxu0 0.0
      %1013 = vmatprep.subr.mxu0 0.0
      %1014 = vmatpush1.msra.mxu0 0.0
      %1015 = vmatprep.subr.mxu0 0.0
      %1016 = vmatpush1.msra.mxu0 0.0
      %1017 = vmatprep.subr.mxu0 0.0
      %1018 = vmatpush1.msra.mxu0 0.0
      %1019 = vmatprep.subr.mxu0 0.0
      %1020 = vmatpush1.msra.mxu0 0.0
      %1021 = vmatprep.subr.mxu0 0.0
      %1022 = vmatpush1.msra.mxu0 0.0
      %1023 = vmatprep.subr.mxu0 0.0
      %1024 = vmatpush1.msra.mxu0 0.0
      %1025 = vmatprep.subr.mxu0 0.0
      %1026 = vmatpush1.msra.mxu0 0.0
      %1027 = vmatprep.subr.mxu0 0.0
      %1028 = vmatpush1.msra.mxu0 0.0
      %1029 = vmatprep.mubr.f32.mxu0 %v961
      %1030 = vmatmul.mubr.f32.gmra.mrb[0].mxu0 %v951
      %v1031 = vpop.f32.mrb[0].mxu0
      %v1032 = vadd.f32 0.0, %v1031
      %v1033 = vpop.f32.mrb[0].mxu0
      %1034 = vmatprep.mubr.f32.mxu0 %v963
      %1035 = vmatmul.mubr.f32.gmra.mrb[0].mxu0 %v956
      %v1036 = vpop.f32.mrb[0].mxu0
      %v1037 = vadd.f32 0.0, %v1036
      %v1038 = vpop.f32.mrb[0].mxu0
      %1039 = vdwg.mxu0
      %v1040 = vadd.f32 %v914, %v1032
      %v1041 = vadd.f32 %v919, %v1037
      %v1042 = vld [vmem:[%s5] sm:$0x1]
      %v1044 = vlaneseq
      %v1045 = vshrl.u32 %v1044, 7
      %v1046 = vsub.s32 0, %v1045
      %v1047 = vrot.slane %v1042, %v1046
      %v1049 = vmul.f32 %v1040, %v1047
      %v1050 = vmul.f32 %v1041, %v1047
      %v1051 = vld [vmem:[%s6] sm:$0x1]
      %v1053 = vlaneseq
      %v1054 = vshrl.u32 %v1053, 7
      %v1055 = vsub.s32 0, %v1054
      %v1056 = vrot.slane %v1051, %v1055
      %v1058 = vadd.f32 %v1049, %v1056
      %v1059 = vadd.f32 %v1050, %v1056
      %v1060 = vadd.f32 %v1058, %v279
      %v1061 = vadd.f32 %v1059, %v280
      %v1062 = vmax.f32 %v1060, 0.0
      %v1063 = vmax.f32 %v1061, 0.0
      %1064 = vst [vmem:[%s278] sm:$0xff] %v1062
      %1065 = vst [vmem:[%s278 + $0x8] sm:$0xff] %v1063
      %p1066 = scmp.lt.s32.totalorder %s18, 1
      %s1067 = scalar_select %p1066, %s18, 1
      %s1068 = smul.addr %s1067, 2
      %s1069 = smul.addr %s1068, 8
      %s1070 = scalar_lea.vmem %s7, %s1069
      // Predicated region
      $region49: #{basic_block_forward.1} parent=47 // pred_check
        %p1071 = pneg %p188
      $region50: #{basic_block_forward.1} parent=47 // pred_check_branch
        %1073 = sbr.rel (%p1071) target = $region52
      $region51: #{basic_block_forward.1} parent=47 // pred_region
        _
      $region52: #{basic_block_forward.1} parent=47 // pred_fallthru
        _
    $region48: #{basic_block_forward.1} parent=5 // pred_fallthru
      _
    %p1074 = scmp.le.s32.totalorder 2, %s13
    // Predicated region
    $region53: #{basic_block_forward.1} parent=5 // pred_check
      %p1075 = pneg %p1074
    $region54: #{basic_block_forward.1} parent=5 // pred_check_branch
      %1077 = sbr.rel (%p1075) target = $region56
    $region55: #{basic_block_forward.1} parent=5 // pred_region
      %s1078 = ssub.s32 %s13, 2
      // Predicated region
      $region57: #{basic_block_forward.1} parent=55 // pred_check
        %p1079 = pneg %p194
      $region58: #{basic_block_forward.1} parent=55 // pred_check_branch
        %1081 = sbr.rel (%p1079) target = $region60
      $region59: #{basic_block_forward.1} parent=55 // pred_region
        %p1082 = scmp.lt.s32.totalorder %s19, 1
        %s1083 = scalar_select %p1082, %s19, 1
        %s1084 = smul.addr %s1083, 2
        %s1085 = smul.addr %s1084, 8
        %s1086 = scalar_lea.vmem %s7, %s1085
      $region60: #{basic_block_forward.1} parent=55 // pred_fallthru
        _
    $region56: #{basic_block_forward.1} parent=5 // pred_fallthru
      _
  $region6: #{basic_block_forward.1} parent=0 // loop_footer
    %s17 = sadd.s32 1, %s13
  $region7: #{basic_block_forward.1} parent=0 // loop_footer_branch
    %12 = sbr.rel target = $region3
  $region8: #{basic_block_forward.1} parent=0 // loop_exit
    _

</llo_original>
